<compile_context>
chip_gen: v7x
topology: tpu7x:2x2x1
jax: 0.10.0
libtpu: 0.0.40
codegen_flags: <defaults>
</compile_context>

<pallas_src>
import functools

import numpy as np
import jax
import jax.numpy as jnp
from jax.experimental import pallas as pl
from jax.experimental.pallas import tpu as pltpu

jax.config.update("jax_default_matmul_precision", "highest")

# Set to jnp.bfloat16 on v6e/v7x for ~3x MXU throughput if the accuracy budget allows
# (accumulation stays f32).  Kept f32 here so the kernel matches the f32 reference tightly.
_MATMUL_DTYPE = jnp.float32


def _mxu_dot(a, b):
    return jnp.dot(a.astype(_MATMUL_DTYPE), b.astype(_MATMUL_DTYPE),
                   preferred_element_type=jnp.float32)


# --------------------------------------------------------------------------------------
# Shared conv helper (trace-time inlined): 'same' stride-1 conv of a flattened (Cin, H*W)
# image in channels-major layout, computed as a single im2col MXU matmul.
# --------------------------------------------------------------------------------------
def _conv_same_s1(x2, w2_ref, b_ref, mask_ref, pbuf, p_ref, *, KH, KW, H, W, LPAD):
    """x2: (Cin, H*W) value.  w2_ref: (Cout, KH*KW*Cin) rows ordered (kh, kw, ci).
    b_ref: (Cout, 1).  mask_ref: (KH*KW, H*W) 0/1 border-validity per tap.
    pbuf: VMEM (Cin, H*W + 2*LPAD) scratch (zero-extended flat image).
    p_ref: VMEM (KH*KW*Cin, H*W) scratch (im2col patch matrix).
    Returns (Cout, H*W) f32."""
    HW = H * W
    Cin = x2.shape[0]
    ph, pw = (KH - 1) // 2, (KW - 1) // 2

    # Zero-extended flat image so out-of-image rows read zeros (in-kernel padding halo).
    pbuf[...] = jnp.zeros_like(pbuf)
    pbuf[:, LPAD:LPAD + HW] = x2
    xp = pbuf[...]                                    # (Cin, HW + 2*LPAD)

    # Build the im2col matrix: one lane-shifted, border-masked copy of the image per tap.
    for kh in range(KH):
        for kw in range(KW):
            t = kh * KW + kw
            d = (kh - ph) * W + (kw - pw)             # flat lane shift of this tap
            patch = xp[:, LPAD + d:LPAD + d + HW]     # (Cin, HW), static slice
            p_ref[t * Cin:(t + 1) * Cin, :] = patch * mask_ref[t:t + 1, :]

    # One MXU matmul per image: (Cout, KH*KW*Cin) @ (KH*KW*Cin, HW); lane-dense result.
    return _mxu_dot(w2_ref[...], p_ref[...]) + b_ref[...]


# --------------------------------------------------------------------------------------
# Kernel 1: current-column conv  cur = W(inputs[-1])  (+ optional activation when there
# are no previous columns).  One grid step = one batch element.
# --------------------------------------------------------------------------------------
def _w_conv_kernel(x_ref, w2_ref, b_ref, mask_ref, out_ref, pbuf, p_ref,
                   *, KH, KW, H, W, LPAD, apply_relu):
    y = _conv_same_s1(x_ref[0], w2_ref, b_ref, mask_ref, pbuf, p_ref,
                      KH=KH, KW=KW, H=H, W=W, LPAD=LPAD)
    if apply_relu:
        y = jnp.maximum(y, 0.0)
    out_ref[0] = y.astype(out_ref.dtype)


def w_conv_pallas(x_flat, w2, b, tap_mask, *, KH, KW, H, W, LPAD, apply_relu):
    N, Cin, HW = x_flat.shape
    Cout, K = w2.shape
    kernel = functools.partial(_w_conv_kernel, KH=KH, KW=KW, H=H, W=W, LPAD=LPAD,
                               apply_relu=apply_relu)
    return pl.pallas_call(
        kernel,
        out_shape=jax.ShapeDtypeStruct((N, Cout, HW), jnp.float32),
        grid=(N,),
        in_specs=[
            pl.BlockSpec((1, Cin, HW), lambda n: (n, 0, 0)),
            pl.BlockSpec((Cout, K), lambda n: (0, 0)),
            pl.BlockSpec((Cout, 1), lambda n: (0, 0)),
            pl.BlockSpec((KH * KW, HW), lambda n: (0, 0)),
        ],
        out_specs=pl.BlockSpec((1, Cout, HW), lambda n: (n, 0, 0)),
        scratch_shapes=[pltpu.VMEM((Cin, HW + 2 * LPAD), jnp.float32),
                        pltpu.VMEM((KH * KW * Cin, HW), jnp.float32)],
        compiler_params=pltpu.CompilerParams(dimension_semantics=("parallel",)),
    )(x_flat, w2, b, tap_mask)


# --------------------------------------------------------------------------------------
# Kernel 2 (fused): s = act(sum_k (alpha_k*V_k)(x_k)) ; out = act(cur + U(s))
# Adapters (1x1 convs), their sum, the U conv, the residual add and the activation all
# happen in one pallas_call -> no HBM round-trip of s.  One grid step = one batch element.
# --------------------------------------------------------------------------------------
def _adapter_uconv_kernel(*refs, col, KH, KW, H, W, LPAD, apply_relu):
    x_prev = refs[:col]                               # col x (1, Cin, HW)
    (vw_ref, vb_ref, uw_ref, ub_ref, mask_ref, cur_ref, out_ref, pbuf, p_ref) = refs[col:]
    Cin = pbuf.shape[0]
    HW = H * W

    # s = act( sum_k (alpha_k * V_w[k]) @ x_k + sum_k V_b[k] )   (alpha folded into V_w)
    s = jnp.zeros((Cin, HW), jnp.float32)
    for k in range(col):
        s = s + _mxu_dot(vw_ref[k], x_prev[k][0])
    s = s + vb_ref[...]
    if apply_relu:
        s = jnp.maximum(s, 0.0)

    # out = act( cur + U(s) )  -- conv, residual add and activation fused.
    y = _conv_same_s1(s, uw_ref, ub_ref, mask_ref, pbuf, p_ref,
                      KH=KH, KW=KW, H=H, W=W, LPAD=LPAD)
    y = y + cur_ref[0]
    if apply_relu:
        y = jnp.maximum(y, 0.0)
    out_ref[0] = y.astype(out_ref.dtype)


def adapter_uconv_pallas(prev_flat, vw_scaled, vb_sum, u2, ub, tap_mask, cur,
                         *, KH, KW, H, W, LPAD, apply_relu):
    col = len(prev_flat)
    N, Cin, HW = prev_flat[0].shape
    Cout, K = u2.shape
    kernel = functools.partial(_adapter_uconv_kernel, col=col, KH=KH, KW=KW,
                               H=H, W=W, LPAD=LPAD, apply_relu=apply_relu)
    in_specs = [pl.BlockSpec((1, Cin, HW), lambda n: (n, 0, 0)) for _ in range(col)]
    in_specs += [
        pl.BlockSpec((col, Cin, Cin), lambda n: (0, 0, 0)),
        pl.BlockSpec((Cin, 1), lambda n: (0, 0)),
        pl.BlockSpec((Cout, K), lambda n: (0, 0)),
        pl.BlockSpec((Cout, 1), lambda n: (0, 0)),
        pl.BlockSpec((KH * KW, HW), lambda n: (0, 0)),
        pl.BlockSpec((1, Cout, HW), lambda n: (n, 0, 0)),
    ]
    return pl.pallas_call(
        kernel,
        out_shape=jax.ShapeDtypeStruct((N, Cout, HW), jnp.float32),
        grid=(N,),
        in_specs=in_specs,
        out_specs=pl.BlockSpec((1, Cout, HW), lambda n: (n, 0, 0)),
        scratch_shapes=[pltpu.VMEM((Cin, HW + 2 * LPAD), jnp.float32),
                        pltpu.VMEM((KH * KW * Cin, HW), jnp.float32)],
        compiler_params=pltpu.CompilerParams(dimension_semantics=("parallel",)),
    )(*prev_flat, vw_scaled, vb_sum, u2, ub, tap_mask, cur)


# --------------------------------------------------------------------------------------
# PNNConvBlock.forward wrapper (parameter-sized prep only; no activation-sized HBM work)
# --------------------------------------------------------------------------------------
def _tap_masks(H, W, KH, KW, padding):
    """(KH*KW, H*W) 0/1 masks: tap (kh,kw) is valid at output q iff the tapped input pixel
    lies inside the image (handles the conv padding border)."""
    q = np.arange(H * W)
    qr, qc = q // W, q % W
    m = np.zeros((KH * KW, H * W), np.float32)
    for kh in range(KH):
        for kw in range(KW):
            dh, dw = kh - padding, kw - padding
            m[kh * KW + kw] = ((qr + dh >= 0) & (qr + dh < H) &
                               (qc + dw >= 0) & (qc + dw < W))
    return jnp.asarray(m)


def pnn_conv_block_forward(inputs, params, *, stride, padding, activation="identity"):
    if not isinstance(inputs, (list, tuple)):
        inputs = [inputs]
    apply_act = (activation == "relu")        # module default activation=None -> Identity

    x_last = inputs[-1]                       # NCHW, used as-is (no transpose)
    N, Cin, H, W = x_last.shape
    Cout, _, KH, KW = params["W_w"].shape
    if stride != 1 or KH != KW or 2 * padding != KH - 1:
        # TODO(synk): general stride / non-'same' padding needs a strided-gather im2col path.
        raise NotImplementedError("optimized Pallas path covers stride=1 'same' convolutions")

    HW = H * W
    K = KH * KW * Cin
    LPAD = ((padding * W + padding + 127) // 128) * 128   # lane-aligned halo for flat shifts
    tap_mask = _tap_masks(H, W, KH, KW, padding)

    has_prev = (params.get("U_w") is not None and params.get("V_w") is not None
                and params["V_w"].shape[0] > 0)
    col = min(params["V_w"].shape[0], len(inputs)) if has_prev else 0
    has_prev = has_prev and col > 0

    # Parameter-sized prep: flatten conv weights to (Cout, KH*KW*Cin) with rows ordered
    # (kh, kw, ci); reshape biases to (C, 1) for lane-broadcast.
    w2 = jnp.transpose(params["W_w"], (0, 2, 3, 1)).reshape(Cout, K)
    wb = params["W_b"].reshape(Cout, 1)

    # cur = W(inputs[-1]);  activation only if there is no previous-column path.
    x_flat = x_last.reshape(N, Cin, HW)       # trailing-dim collapse: no data movement
    cur = w_conv_pallas(x_flat, w2, wb, tap_mask, KH=KH, KW=KW, H=H, W=W, LPAD=LPAD,
                        apply_relu=(apply_act and not has_prev))

    if has_prev:
        u2 = jnp.transpose(params["U_w"], (0, 2, 3, 1)).reshape(Cout, K)
        ub = params["U_b"].reshape(Cout, 1)
        # Fold alpha_k into V_w[k] and pre-sum the V biases (parameter-sized work).
        vw_scaled = params["V_w"][:col] * params["alphas"][:col].reshape(col, 1, 1)
        vb_sum = jnp.sum(params["V_b"][:col], axis=0).reshape(Cin, 1)
        prev_flat = [inputs[k].reshape(N, Cin, HW) for k in range(col)]
        out = adapter_uconv_pallas(prev_flat, vw_scaled, vb_sum, u2, ub, tap_mask, cur,
                                   KH=KH, KW=KW, H=H, W=W, LPAD=LPAD, apply_relu=apply_act)
    else:
        out = cur
    return out.reshape(N, Cout, H, W)         # trailing-dim split: no data movement


# --------------------------------------------------------------------------------------
# Pure-JAX reference (for correctness check)
# --------------------------------------------------------------------------------------
def reference_forward(inputs, params, *, stride, padding, activation="identity"):
    if not isinstance(inputs, (list, tuple)):
        inputs = [inputs]
    act = (lambda t: jnp.maximum(t, 0.0)) if activation == "relu" else (lambda t: t)

    def conv(x, w, b):
        y = jax.lax.conv_general_dilated(
            x, w, (stride, stride), [(padding, padding), (padding, padding)],
            dimension_numbers=("NCHW", "OIHW", "NCHW"))
        return y + b.reshape(1, -1, 1, 1)

    cur = conv(inputs[-1], params["W_w"], params["W_b"])
    has_prev = params.get("U_w") is not None and params["V_w"].shape[0] > 0
    col = min(params["V_w"].shape[0], len(inputs)) if has_prev else 0
    if col > 0:
        s = 0.0
        for k in range(col):
            xk = params["alphas"][k] * inputs[k]
            s = (s + jnp.einsum("oc,nchw->nohw", params["V_w"][k], xk)
                 + params["V_b"][k].reshape(1, -1, 1, 1))
        out = act(cur + conv(act(s), params["U_w"], params["U_b"]))
    else:
        out = act(cur)
    return out


if __name__ == "__main__":
    # col=2, depth=1 (so U, V, alphas exist); conv: ch_in=4 -> ch_out=8, kernel=3,
    # stride=1, padding=1; inputs = col+1 NCHW tensors (last = current column).
    N, Cin, H, W = 2, 4, 16, 16
    Cout, KH, KW, stride, padding = 8, 3, 3, 1, 1
    col = 2

    key = jax.random.PRNGKey(0)
    keys = jax.random.split(key, 7 + col)
    # TODO(synk): SlimConv2d's custom initializer / np.random.choice alpha are replaced with
    # deterministic PRNG init of the same shapes; alpha fixed to 0.1.
    params = {
        "W_w": 0.1 * jax.random.normal(keys[0], (Cout, Cin, KH, KW), jnp.float32),
        "W_b": 0.1 * jax.random.normal(keys[1], (Cout,), jnp.float32),
        "U_w": 0.1 * jax.random.normal(keys[2], (Cout, Cin, KH, KW), jnp.float32),
        "U_b": 0.1 * jax.random.normal(keys[3], (Cout,), jnp.float32),
        "V_w": 0.1 * jax.random.normal(keys[4], (col, Cin, Cin), jnp.float32),
        "V_b": 0.1 * jax.random.normal(keys[5], (col, Cin), jnp.float32),
        "alphas": jnp.full((col,), 0.1, jnp.float32),
    }
    inputs = [jax.random.normal(keys[6 + i], (N, Cin, H, W), jnp.float32)
              for i in range(col + 1)]

    out = pnn_conv_block_forward(inputs, params, stride=stride, padding=padding,
                                 activation="identity")   # module default: nn.Identity
    out = jax.block_until_ready(out)

    ref = reference_forward(inputs, params, stride=stride, padding=padding,
                            activation="identity")
    np.testing.assert_allclose(np.asarray(out), np.asarray(ref), rtol=1e-3, atol=1e-3)
    assert out.shape == (N, Cout, H, W)
    print("KERNEL_OK")
</pallas_src>

<mosaic_0001>
module attributes {stable_mosaic.version = 11 : i64} {
  func.func @_w_conv_kernel(%arg0: i32, %arg1: memref<1x4x256xf32, #tpu.memory_space<vmem>>, %arg2: memref<8x36xf32, #tpu.memory_space<vmem>>, %arg3: memref<8x1xf32, #tpu.memory_space<vmem>>, %arg4: memref<9x256xf32, #tpu.memory_space<vmem>>, %arg5: memref<1x8x256xf32, #tpu.memory_space<vmem>>, %arg6: memref<4x512xf32, #tpu.memory_space<vmem>>, %arg7: memref<36x256xf32, #tpu.memory_space<vmem>>) attributes {dimension_semantics = [#tpu.dimension_semantics<parallel>], iteration_bounds = array<i64: 2>, scalar_prefetch = 0 : i64, scratch_operands = 2 : i64, tpu.core_type = #tpu.core_type<tc>, window_params = [{transform_indices = @transform_0, window_bounds = array<i64: 1, 4, 256>}, {pipeline_mode = #tpu.pipeline_mode<synchronous>, transform_indices = @transform_1, window_bounds = array<i64: 8, 36>}, {pipeline_mode = #tpu.pipeline_mode<synchronous>, transform_indices = @transform_2, window_bounds = array<i64: 8, 1>}, {pipeline_mode = #tpu.pipeline_mode<synchronous>, transform_indices = @transform_3, window_bounds = array<i64: 9, 256>}, {transform_indices = @transform_4, window_bounds = array<i64: 1, 8, 256>}]} {
    %c0 = arith.constant 0 : index
    %c0_0 = arith.constant 0 : index
    %c0_1 = arith.constant 0 : index
    %0 = vector.load %arg1[%c0, %c0_0, %c0_1] : memref<1x4x256xf32, #tpu.memory_space<vmem>>, vector<1x4x256xf32>
    %1 = vector.shape_cast %0 : vector<1x4x256xf32> to vector<4x256xf32>
    %cst = arith.constant 0.000000e+00 : f32
    %2 = vector.broadcast %cst : f32 to vector<4x512xf32>
    %c0_2 = arith.constant 0 : index
    %c0_3 = arith.constant 0 : index
    %3 = vector.load %arg6[%c0_2, %c0_3] : memref<4x512xf32, #tpu.memory_space<vmem>>, vector<4x512xf32>
    tpu.vector_store %arg6[%c0_2, %c0_3], %2 {strides = array<i32>} : memref<4x512xf32, #tpu.memory_space<vmem>>, vector<4x512xf32>,
    %c0_4 = arith.constant 0 : index
    %c128 = arith.constant 128 : index
    %4 = vector.load %arg6[%c0_4, %c128] : memref<4x512xf32, #tpu.memory_space<vmem>>, vector<4x256xf32>
    tpu.vector_store %arg6[%c0_4, %c128], %1 {strides = array<i32>} : memref<4x512xf32, #tpu.memory_space<vmem>>, vector<4x256xf32>,
    %c0_5 = arith.constant 0 : index
    %c0_6 = arith.constant 0 : index
    %5 = vector.load %arg6[%c0_5, %c0_6] : memref<4x512xf32, #tpu.memory_space<vmem>>, vector<4x512xf32>
    %6 = vector.extract_strided_slice %5 {offsets = [0, 111], sizes = [4, 256], strides = [1, 1]} : vector<4x512xf32> to vector<4x256xf32>
    %c0_7 = arith.constant 0 : index
    %c0_8 = arith.constant 0 : index
    %7 = vector.load %arg4[%c0_7, %c0_8] : memref<9x256xf32, #tpu.memory_space<vmem>>, vector<1x256xf32>
    %8 = vector.broadcast %7 : vector<1x256xf32> to vector<4x256xf32>
    %9 = arith.mulf %6, %8 : vector<4x256xf32>
    %c0_9 = arith.constant 0 : index
    %c0_10 = arith.constant 0 : index
    %10 = vector.load %arg7[%c0_9, %c0_10] : memref<36x256xf32, #tpu.memory_space<vmem>>, vector<4x256xf32>
    tpu.vector_store %arg7[%c0_9, %c0_10], %9 {strides = array<i32>} : memref<36x256xf32, #tpu.memory_space<vmem>>, vector<4x256xf32>,
    %11 = vector.extract_strided_slice %5 {offsets = [0, 112], sizes = [4, 256], strides = [1, 1]} : vector<4x512xf32> to vector<4x256xf32>
    %c1 = arith.constant 1 : index
    %c0_11 = arith.constant 0 : index
    %12 = vector.load %arg4[%c1, %c0_11] : memref<9x256xf32, #tpu.memory_space<vmem>>, vector<1x256xf32>
    %13 = vector.broadcast %12 : vector<1x256xf32> to vector<4x256xf32>
    %14 = arith.mulf %11, %13 : vector<4x256xf32>
    %c4 = arith.constant 4 : index
    %c0_12 = arith.constant 0 : index
    %15 = vector.load %arg7[%c4, %c0_12] : memref<36x256xf32, #tpu.memory_space<vmem>>, vector<4x256xf32>
    tpu.vector_store %arg7[%c4, %c0_12], %14 {strides = array<i32>} : memref<36x256xf32, #tpu.memory_space<vmem>>, vector<4x256xf32>,
    %16 = vector.extract_strided_slice %5 {offsets = [0, 113], sizes = [4, 256], strides = [1, 1]} : vector<4x512xf32> to vector<4x256xf32>
    %c2 = arith.constant 2 : index
    %c0_13 = arith.constant 0 : index
    %17 = vector.load %arg4[%c2, %c0_13] : memref<9x256xf32, #tpu.memory_space<vmem>>, vector<1x256xf32>
    %18 = vector.broadcast %17 : vector<1x256xf32> to vector<4x256xf32>
    %19 = arith.mulf %16, %18 : vector<4x256xf32>
    %c8 = arith.constant 8 : index
    %c0_14 = arith.constant 0 : index
    %20 = vector.load %arg7[%c8, %c0_14] : memref<36x256xf32, #tpu.memory_space<vmem>>, vector<4x256xf32>
    tpu.vector_store %arg7[%c8, %c0_14], %19 {strides = array<i32>} : memref<36x256xf32, #tpu.memory_space<vmem>>, vector<4x256xf32>,
    %21 = vector.extract_strided_slice %5 {offsets = [0, 127], sizes = [4, 256], strides = [1, 1]} : vector<4x512xf32> to vector<4x256xf32>
    %c3 = arith.constant 3 : index
    %c0_15 = arith.constant 0 : index
    %22 = vector.load %arg4[%c3, %c0_15] : memref<9x256xf32, #tpu.memory_space<vmem>>, vector<1x256xf32>
    %23 = vector.broadcast %22 : vector<1x256xf32> to vector<4x256xf32>
    %24 = arith.mulf %21, %23 : vector<4x256xf32>
    %c12 = arith.constant 12 : index
    %c0_16 = arith.constant 0 : index
    %25 = vector.load %arg7[%c12, %c0_16] : memref<36x256xf32, #tpu.memory_space<vmem>>, vector<4x256xf32>
    tpu.vector_store %arg7[%c12, %c0_16], %24 {strides = array<i32>} : memref<36x256xf32, #tpu.memory_space<vmem>>, vector<4x256xf32>,
    %26 = vector.extract_strided_slice %5 {offsets = [0, 128], sizes = [4, 256], strides = [1, 1]} : vector<4x512xf32> to vector<4x256xf32>
    %c4_17 = arith.constant 4 : index
    %c0_18 = arith.constant 0 : index
    %27 = vector.load %arg4[%c4_17, %c0_18] : memref<9x256xf32, #tpu.memory_space<vmem>>, vector<1x256xf32>
    %28 = vector.broadcast %27 : vector<1x256xf32> to vector<4x256xf32>
    %29 = arith.mulf %26, %28 : vector<4x256xf32>
    %c16 = arith.constant 16 : index
    %c0_19 = arith.constant 0 : index
    %30 = vector.load %arg7[%c16, %c0_19] : memref<36x256xf32, #tpu.memory_space<vmem>>, vector<4x256xf32>
    tpu.vector_store %arg7[%c16, %c0_19], %29 {strides = array<i32>} : memref<36x256xf32, #tpu.memory_space<vmem>>, vector<4x256xf32>,
    %31 = vector.extract_strided_slice %5 {offsets = [0, 129], sizes = [4, 256], strides = [1, 1]} : vector<4x512xf32> to vector<4x256xf32>
    %c5 = arith.constant 5 : index
    %c0_20 = arith.constant 0 : index
    %32 = vector.load %arg4[%c5, %c0_20] : memref<9x256xf32, #tpu.memory_space<vmem>>, vector<1x256xf32>
    %33 = vector.broadcast %32 : vector<1x256xf32> to vector<4x256xf32>
    %34 = arith.mulf %31, %33 : vector<4x256xf32>
    %c20 = arith.constant 20 : index
    %c0_21 = arith.constant 0 : index
    %35 = vector.load %arg7[%c20, %c0_21] : memref<36x256xf32, #tpu.memory_space<vmem>>, vector<4x256xf32>
    tpu.vector_store %arg7[%c20, %c0_21], %34 {strides = array<i32>} : memref<36x256xf32, #tpu.memory_space<vmem>>, vector<4x256xf32>,
    %36 = vector.extract_strided_slice %5 {offsets = [0, 143], sizes = [4, 256], strides = [1, 1]} : vector<4x512xf32> to vector<4x256xf32>
    %c6 = arith.constant 6 : index
    %c0_22 = arith.constant 0 : index
    %37 = vector.load %arg4[%c6, %c0_22] : memref<9x256xf32, #tpu.memory_space<vmem>>, vector<1x256xf32>
    %38 = vector.broadcast %37 : vector<1x256xf32> to vector<4x256xf32>
    %39 = arith.mulf %36, %38 : vector<4x256xf32>
    %c24 = arith.constant 24 : index
    %c0_23 = arith.constant 0 : index
    %40 = vector.load %arg7[%c24, %c0_23] : memref<36x256xf32, #tpu.memory_space<vmem>>, vector<4x256xf32>
    tpu.vector_store %arg7[%c24, %c0_23], %39 {strides = array<i32>} : memref<36x256xf32, #tpu.memory_space<vmem>>, vector<4x256xf32>,
    %41 = vector.extract_strided_slice %5 {offsets = [0, 144], sizes = [4, 256], strides = [1, 1]} : vector<4x512xf32> to vector<4x256xf32>
    %c7 = arith.constant 7 : index
    %c0_24 = arith.constant 0 : index
    %42 = vector.load %arg4[%c7, %c0_24] : memref<9x256xf32, #tpu.memory_space<vmem>>, vector<1x256xf32>
    %43 = vector.broadcast %42 : vector<1x256xf32> to vector<4x256xf32>
    %44 = arith.mulf %41, %43 : vector<4x256xf32>
    %c28 = arith.constant 28 : index
    %c0_25 = arith.constant 0 : index
    %45 = vector.load %arg7[%c28, %c0_25] : memref<36x256xf32, #tpu.memory_space<vmem>>, vector<4x256xf32>
    tpu.vector_store %arg7[%c28, %c0_25], %44 {strides = array<i32>} : memref<36x256xf32, #tpu.memory_space<vmem>>, vector<4x256xf32>,
    %46 = vector.extract_strided_slice %5 {offsets = [0, 145], sizes = [4, 256], strides = [1, 1]} : vector<4x512xf32> to vector<4x256xf32>
    %c8_26 = arith.constant 8 : index
    %c0_27 = arith.constant 0 : index
    %47 = vector.load %arg4[%c8_26, %c0_27] : memref<9x256xf32, #tpu.memory_space<vmem>>, vector<1x256xf32>
    %48 = vector.broadcast %47 : vector<1x256xf32> to vector<4x256xf32>
    %49 = arith.mulf %46, %48 : vector<4x256xf32>
    %c32 = arith.constant 32 : index
    %c0_28 = arith.constant 0 : index
    %50 = vector.load %arg7[%c32, %c0_28] : memref<36x256xf32, #tpu.memory_space<vmem>>, vector<4x256xf32>
    tpu.vector_store %arg7[%c32, %c0_28], %49 {strides = array<i32>} : memref<36x256xf32, #tpu.memory_space<vmem>>, vector<4x256xf32>,
    %c0_29 = arith.constant 0 : index
    %c0_30 = arith.constant 0 : index
    %51 = vector.load %arg2[%c0_29, %c0_30] : memref<8x36xf32, #tpu.memory_space<vmem>>, vector<8x36xf32>
    %c0_31 = arith.constant 0 : index
    %c0_32 = arith.constant 0 : index
    %52 = vector.load %arg7[%c0_31, %c0_32] : memref<36x256xf32, #tpu.memory_space<vmem>>, vector<36x256xf32>
    %cst_33 = arith.constant dense<0.000000e+00> : vector<8x256xf32>
    %53 = tpu.matmul %51, %52, %cst_33 {dimension_numbers = #tpu.dot_dimension_numbers<[1], [0], [0], [1], [0, 0, 1, 1], [], []>, precision = #tpu.contract_precision<fp32>} : vector<8x36xf32>, vector<36x256xf32>, vector<8x256xf32> -> vector<8x256xf32>
    %c0_34 = arith.constant 0 : index
    %c0_35 = arith.constant 0 : index
    %54 = vector.load %arg3[%c0_34, %c0_35] : memref<8x1xf32, #tpu.memory_space<vmem>>, vector<8x1xf32>
    %55 = vector.broadcast %54 : vector<8x1xf32> to vector<8x256xf32>
    %56 = arith.addf %53, %55 : vector<8x256xf32>
    %c0_36 = arith.constant 0 : index
    %c0_37 = arith.constant 0 : index
    %c0_38 = arith.constant 0 : index
    %57 = vector.load %arg5[%c0_36, %c0_37, %c0_38] : memref<1x8x256xf32, #tpu.memory_space<vmem>>, vector<1x8x256xf32>
    %58 = vector.shape_cast %57 : vector<1x8x256xf32> to vector<8x256xf32>
    %59 = vector.shape_cast %56 : vector<8x256xf32> to vector<1x8x256xf32>
    tpu.vector_store %arg5[%c0_36, %c0_37, %c0_38], %59 {strides = array<i32>} : memref<1x8x256xf32, #tpu.memory_space<vmem>>, vector<1x8x256xf32>,
    return
  }
  func.func @transform_0(%arg0: i32) -> (i32, i32, i32) {
    %c0_i32 = arith.constant 0 : i32
    %c0_i32_0 = arith.constant 0 : i32
    %c0_i32_1 = arith.constant 0 : i32
    return %arg0, %c0_i32, %c0_i32_0 : i32, i32, i32
  }
  func.func @transform_1(%arg0: i32) -> (i32, i32) {
    %c0_i32 = arith.constant 0 : i32
    %c0_i32_0 = arith.constant 0 : i32
    %c0_i32_1 = arith.constant 0 : i32
    return %c0_i32, %c0_i32_0 : i32, i32
  }
  func.func @transform_2(%arg0: i32) -> (i32, i32) {
    %c0_i32 = arith.constant 0 : i32
    %c0_i32_0 = arith.constant 0 : i32
    %c0_i32_1 = arith.constant 0 : i32
    return %c0_i32, %c0_i32_0 : i32, i32
  }
  func.func @transform_3(%arg0: i32) -> (i32, i32) {
    %c0_i32 = arith.constant 0 : i32
    %c0_i32_0 = arith.constant 0 : i32
    %c0_i32_1 = arith.constant 0 : i32
    return %c0_i32, %c0_i32_0 : i32, i32
  }
  func.func @transform_4(%arg0: i32) -> (i32, i32, i32) {
    %c0_i32 = arith.constant 0 : i32
    %c0_i32_0 = arith.constant 0 : i32
    %c0_i32_1 = arith.constant 0 : i32
    return %arg0, %c0_i32, %c0_i32_0 : i32, i32, i32
  }
}

</mosaic_0001>

<llo_original>
// kernel: tpu_custom_call.1
$region0: #{tpu_custom_call.1}
  #allocation0 [shape = 'u32[]', space=smem, size = 0x4, offset = 0x4, fixed_abs, tag = 'smem constant byte address 0x4 - core index']
  #allocation1 [shape = 'u32[144,128]{1,0:T(1,128)}', space=vmem, size = 0x12000, scoped, tag = 'internal scratch']
  #allocation2 [shape = 'f32[4,512]{1,0:T(4,128)}', space=vmem, size = 0x2000, scoped, tag = 'scratch operand']
  #allocation3 [shape = 'f32[36,256]{1,0:T(8,128)}', space=vmem, size = 0xa000, scoped, tag = 'scratch operand']
  %s0 = inlined_call_operand.hbm [shape: f32[2,4,256], index: 0, kind: input, shape index: {}]
  %s1 = inlined_call_operand.vmem [shape: f32[8,36], index: 1, kind: input, shape index: {}]
  %s2 = inlined_call_operand.vmem [shape: f32[8,1], index: 2, kind: input, shape index: {}]
  %s3 = inlined_call_operand.hbm [shape: f32[9,256], index: 3, kind: input, shape index: {}]
  %s4 = inlined_call_operand.hbm [shape: f32[2,8,256], index: 4, kind: output, shape index: {}]
  %s5 = sld [smem:[#allocation0]]
  $region57: #{tpu_custom_call.1} parent=0
    _
  %s7 = ssub.s32 1, %s5
  %s8 = scalar_select 0, %s7, %s5
  $region1: #{tpu_custom_call.1} parent=0
    #allocation4 [shape = 'u8[8192]{0}', space=vmem, size = 0x2000, scoped, tag = 'input window, operand 0']
    #allocation5 [shape = 's32[2]{0}', space=sflag, size = 0x8, scoped, tag = 'scoped memory for tpu_custom_call.1']
    #allocation6 [shape = 's32[2]{0}', space=sflag, size = 0x8, scoped, tag = 'scoped memory for tpu_custom_call.1']
    #allocation7 [shape = 'u8[16384]{0}', space=vmem, size = 0x4000, scoped, tag = 'input window, operand 3, single buffered']
    #allocation8 [shape = 's32[1]{0}', space=sflag, size = 0x4, scoped, tag = 'scoped memory for tpu_custom_call.1']
    #allocation9 [shape = 'u8[16384]{0}', space=vmem, size = 0x4000, scoped, tag = 'output window, operand 0']
    %9 = vsyncpa [#allocation5], 0
    %s10 = scalar_lea.sflag [#allocation5], 1
    %11 = vsyncpa %s10, 0
    %12 = vsyncpa [#allocation8], 0
    %13 = vsyncpa [#allocation6], 0
    %s14 = scalar_lea.sflag [#allocation6], 1
    %15 = vsyncpa %s14, 0
    loop: start=0, step=1, limit=4
    $region2: #{tpu_custom_call.1} parent=1 // loop_pre_header
      _
    $region3: #{tpu_custom_call.1} parent=1 // loop_header
      %s17 = sphi 0, %s21
      %p18 = scmp.ge.s32.totalorder %s17, 4
      %s27 = sphi 0, %s29
      %s30 = sphi 0, %s27
      %s31 = sphi 0, %s30
      %s47 = sphi 0, %s31
      %s51 = sphi 0, %s51
      %s53 = sphi 0, %s51
      %s54 = sphi 0, %s53
      %s68 = sphi 0, %s54
      %s72 = sphi 0, %s72
      %s74 = sphi 0, %s72
      %s75 = sphi 0, %s74
      %s89 = sphi 0, %s75
      %s93 = sphi 0, %s93
      %s95 = sphi 0, %s93
      %s96 = sphi 0, %s95
      %s110 = sphi 0, %s96
      %s116 = sphi 0, %s118
      %s119 = sphi 0, %s116
      %s120 = sphi 0, %s119
      %s136 = sphi 0, %s120
    $region4: #{tpu_custom_call.1} parent=1 // loop_header_branch
      %20 = sbr.rel (%p18) target = $region8
    $region5: #{tpu_custom_call.1} parent=1 // loop_body
      %s22 = ssub.s32 %s17, 1
      %s23 = ssub.s32 %s17, 2
      %s24 = sadd.s32 %s17, 1
      %s25 = ssub.s32 %s17, %s24
      %p26 = scmp.eq.s32.totalorder %s25, 0
      %s28 = sadd.s32 %s27, 1
      %s29 = scalar_select %p26, %s27, %s28
      %p32 = pneg %p26
      %p33 = scmp.eq.s32.totalorder %s17, 1
      %p34 = por %p32, %p33
      %p35 = scmp.ne.s32.totalorder %s27, %s30
      %p36 = scmp.eq.s32.totalorder %s17, 0
      %p37 = por %p35, %p36
      %p38 = scmp.ne.s32.totalorder %s27, %s30
      %p39 = scmp.eq.s32.totalorder %s22, 1
      %p40 = por %p38, %p39
      %p41 = scmp.ne.s32.totalorder %s30, %s31
      %p42 = scmp.eq.s32.totalorder %s22, 0
      %p43 = por %p41, %p42
      %p44 = scmp.ne.s32.totalorder %s30, %s31
      %p45 = scmp.eq.s32.totalorder %s23, 1
      %p46 = por %p44, %p45
      %p48 = scmp.ne.s32.totalorder %s31, %s47
      %p49 = scmp.eq.s32.totalorder %s23, 0
      %p50 = por %p48, %p49
      %s52 = sadd.s32 %s51, 1
      %p55 = scmp.eq.s32.totalorder %s17, 1
      %p56 = scmp.ne.s32.totalorder %s51, %s53
      %p57 = scmp.eq.s32.totalorder %s17, 0
      %p58 = por %p56, %p57
      %p59 = scmp.ne.s32.totalorder %s51, %s53
      %p60 = scmp.eq.s32.totalorder %s22, 1
      %p61 = por %p59, %p60
      %p62 = scmp.ne.s32.totalorder %s53, %s54
      %p63 = scmp.eq.s32.totalorder %s22, 0
      %p64 = por %p62, %p63
      %p65 = scmp.ne.s32.totalorder %s53, %s54
      %p66 = scmp.eq.s32.totalorder %s23, 1
      %p67 = por %p65, %p66
      %p69 = scmp.ne.s32.totalorder %s54, %s68
      %p70 = scmp.eq.s32.totalorder %s23, 0
      %p71 = por %p69, %p70
      %s73 = sadd.s32 %s72, 1
      %p76 = scmp.eq.s32.totalorder %s17, 1
      %p77 = scmp.ne.s32.totalorder %s72, %s74
      %p78 = scmp.eq.s32.totalorder %s17, 0
      %p79 = por %p77, %p78
      %p80 = scmp.ne.s32.totalorder %s72, %s74
      %p81 = scmp.eq.s32.totalorder %s22, 1
      %p82 = por %p80, %p81
      %p83 = scmp.ne.s32.totalorder %s74, %s75
      %p84 = scmp.eq.s32.totalorder %s22, 0
      %p85 = por %p83, %p84
      %p86 = scmp.ne.s32.totalorder %s74, %s75
      %p87 = scmp.eq.s32.totalorder %s23, 1
      %p88 = por %p86, %p87
      %p90 = scmp.ne.s32.totalorder %s75, %s89
      %p91 = scmp.eq.s32.totalorder %s23, 0
      %p92 = por %p90, %p91
      %s94 = sadd.s32 %s93, 1
      %p97 = scmp.eq.s32.totalorder %s17, 1
      %p98 = scmp.ne.s32.totalorder %s93, %s95
      %p99 = scmp.eq.s32.totalorder %s17, 0
      %p100 = por %p98, %p99
      %p101 = scmp.ne.s32.totalorder %s93, %s95
      %p102 = scmp.eq.s32.totalorder %s22, 1
      %p103 = por %p101, %p102
      %p104 = scmp.ne.s32.totalorder %s95, %s96
      %p105 = scmp.eq.s32.totalorder %s22, 0
      %p106 = por %p104, %p105
      %p107 = scmp.ne.s32.totalorder %s95, %s96
      %p108 = scmp.eq.s32.totalorder %s23, 1
      %p109 = por %p107, %p108
      %p111 = scmp.ne.s32.totalorder %s96, %s110
      %p112 = scmp.eq.s32.totalorder %s23, 0
      %p113 = por %p111, %p112
      %s114 = ssub.s32 %s17, %s24
      %p115 = scmp.eq.s32.totalorder %s114, 0
      %s117 = sadd.s32 %s116, 1
      %s118 = scalar_select %p115, %s116, %s117
      %p121 = pneg %p115
      %p122 = scmp.eq.s32.totalorder %s17, 1
      %p123 = por %p121, %p122
      %p124 = scmp.ne.s32.totalorder %s116, %s119
      %p125 = scmp.eq.s32.totalorder %s17, 0
      %p126 = por %p124, %p125
      %p127 = scmp.ne.s32.totalorder %s116, %s119
      %p128 = scmp.eq.s32.totalorder %s22, 1
      %p129 = por %p127, %p128
      %p130 = scmp.ne.s32.totalorder %s119, %s120
      %p131 = scmp.eq.s32.totalorder %s22, 0
      %p132 = por %p130, %p131
      %p133 = scmp.ne.s32.totalorder %s119, %s120
      %p134 = scmp.eq.s32.totalorder %s23, 1
      %p135 = por %p133, %p134
      %p137 = scmp.ne.s32.totalorder %s120, %s136
      %p138 = scmp.eq.s32.totalorder %s23, 0
      %p139 = por %p137, %p138
      %p140 = scmp.le.s32.totalorder 1, %s17
      %p141 = scmp.lt.s32.totalorder %s17, 3
      %p142 = pnand %p140, %p141
      %p143 = pneg %p142
      // Predicated region
      $region9: #{tpu_custom_call.1} parent=5 // pred_check
        _
      $region10: #{tpu_custom_call.1} parent=5 // pred_check_branch
        %145 = sbr.rel (%p142) target = $region12
      $region11: #{tpu_custom_call.1} parent=5 // pred_region
        %s146 = ssub.s32 %s17, 1
        // Predicated region
        $region13: #{tpu_custom_call.1} parent=11 // pred_check
          %p147 = pneg %p64
        $region14: #{tpu_custom_call.1} parent=11 // pred_check_branch
          %149 = sbr.rel (%p147) target = $region16
        $region15: #{tpu_custom_call.1} parent=11 // pred_region
          _
        $region16: #{tpu_custom_call.1} parent=11 // pred_fallthru
          _
        // Predicated region
        $region17: #{tpu_custom_call.1} parent=11 // pred_check
          %p150 = pneg %p85
        $region18: #{tpu_custom_call.1} parent=11 // pred_check_branch
          %152 = sbr.rel (%p150) target = $region20
        $region19: #{tpu_custom_call.1} parent=11 // pred_region
          _
        $region20: #{tpu_custom_call.1} parent=11 // pred_fallthru
          _
        // Predicated region
        $region21: #{tpu_custom_call.1} parent=11 // pred_check
          %p153 = pneg %p106
        $region22: #{tpu_custom_call.1} parent=11 // pred_check_branch
          %155 = sbr.rel (%p153) target = $region24
        $region23: #{tpu_custom_call.1} parent=11 // pred_region
          %s157 = ssub.s32 512, 512
          %158 = vsyncadd [#allocation8], %s157
          %s159 = sshll.u32 [#allocation7], 4
          %s160 = int_to_ptr.vmem [resolvable:$true] %s159
          %165 = dma.hbm_to_vmem [thread:$0]  %s3, 512, %s160, [#allocation8], 256, 256, 16
        $region24: #{tpu_custom_call.1} parent=11 // pred_fallthru
          _
      $region12: #{tpu_custom_call.1} parent=5 // pred_fallthru
        _
      %p166 = scmp.lt.s32.totalorder %s17, 2
      // Predicated region
      $region25: #{tpu_custom_call.1} parent=5 // pred_check
        %p167 = pneg %p166
      $region26: #{tpu_custom_call.1} parent=5 // pred_check_branch
        %169 = sbr.rel (%p167) target = $region28
      $region27: #{tpu_custom_call.1} parent=5 // pred_region
        // Predicated region
        $region29: #{tpu_custom_call.1} parent=27 // pred_check
          %p170 = pneg %p37
        $region30: #{tpu_custom_call.1} parent=27 // pred_check_branch
          %172 = sbr.rel (%p170) target = $region32
        $region31: #{tpu_custom_call.1} parent=27 // pred_region
          %s173 = sand.u32 %s27, 1
          %s174 = scalar_lea.sflag [#allocation5], %s173
          %s175 = sand.u32 %s27, 1
          %s176 = smul.addr %s175, 8
          %s177 = scalar_lea.vmem [#allocation4], %s176
          %s179 = ssub.s32 128, 128
          %180 = vsyncadd %s174, %s179
          %s181 = smul.addr %s17, 2
          %s182 = smul.addr %s181, 64
          %s183 = scalar_lea.hbm %s0, %s182
          %s185 = sshll.u32 %s177, 4
          %s186 = int_to_ptr.vmem [resolvable:$true] %s185
          %188 = dma.hbm_to_vmem [thread:$0]  %s183, 128, %s186, %s174
        $region32: #{tpu_custom_call.1} parent=27 // pred_fallthru
          _
      $region28: #{tpu_custom_call.1} parent=5 // pred_fallthru
        _
      %p189 = scmp.le.s32.totalorder 1, %s17
      %p190 = scmp.lt.s32.totalorder %s17, 3
      %p191 = pnand %p189, %p190
      %p192 = pneg %p191
      // Predicated region
      $region33: #{tpu_custom_call.1} parent=5 // pred_check
        _
      $region34: #{tpu_custom_call.1} parent=5 // pred_check_branch
        %194 = sbr.rel (%p191) target = $region36
      $region35: #{tpu_custom_call.1} parent=5 // pred_region
        %s195 = ssub.s32 %s17, 1
        %s196 = sand.u32 %s30, 1
        %s197 = scalar_lea.sflag [#allocation5], %s196
        %s198 = sand.u32 %s30, 1
        %s199 = smul.addr %s198, 8
        %s200 = scalar_lea.vmem [#allocation4], %s199
        // Predicated region
        $region37: #{tpu_custom_call.1} parent=35 // pred_check
          %p201 = pneg %p43
        $region38: #{tpu_custom_call.1} parent=35 // pred_check_branch
          %203 = sbr.rel (%p201) target = $region40
        $region39: #{tpu_custom_call.1} parent=35 // pred_region
          %204 = dma.done %s197, 128
        $region40: #{tpu_custom_call.1} parent=35 // pred_fallthru
          _
        // Predicated region
        $region41: #{tpu_custom_call.1} parent=35 // pred_check
          %p205 = pneg %p106
        $region42: #{tpu_custom_call.1} parent=35 // pred_check_branch
          %207 = sbr.rel (%p205) target = $region44
        $region43: #{tpu_custom_call.1} parent=35 // pred_region
          %208 = dma.done [#allocation8], 512
        $region44: #{tpu_custom_call.1} parent=35 // pred_fallthru
          _
        %s209 = sand.u32 %s30, 1
        %s210 = scalar_lea.sflag [#allocation5], %s209
        %s211 = sand.u32 %s30, 1
        %s212 = smul.addr %s211, 8
        %s213 = scalar_lea.vmem [#allocation4], %s212
        %p214 = pneg %p43
        %p215 = pneg %p40
        %p216 = pneg %p64
        %p217 = pneg %p61
        %p218 = pneg %p85
        %p219 = pneg %p82
        %p220 = pneg %p106
        %p221 = pneg %p103
        %p222 = pneg %p132
        %p223 = pneg %p129
        %s224 = sand.u32 %s119, 1
        %s225 = scalar_lea.sflag [#allocation6], %s224
        %s226 = sand.u32 %s119, 1
        %s227 = smul.addr %s226, 16
        %s228 = scalar_lea.vmem [#allocation9], %s227
        %v229 = vld [vmem:[%s200] sm:$0xff]
        %230 = vst [vmem:[#allocation2] sm:$0xff] 0.0
        %231 = vst [vmem:[#allocation2 + $0x8] sm:$0xff] 0.0
        %232 = vst [vmem:[#allocation2 + $0x4] sm:$0xff] %v229
        %v233 = vld [vmem:[#allocation2] sm:$0xff]
        %v234 = vld [vmem:[#allocation2 + $0x8] sm:$0xff]
        %v235 = vld [vmem:[#allocation7] ss:$8 sm:$0x3]
        %v237 = vlaneseq
        %v238 = vshrl.u32 %v237, 7
        %v239 = vsub.s32 0, %v238
        %v240 = vrot.slane %v235, %v239
        %v241 = vlaneseq
        %v242 = vshrl.u32 %v241, 7
        %v243 = vsub.s32 1, %v242
        %v244 = vrot.slane %v235, %v243
        %v245 = vcombine.low %v240, %v244
        %246 = vrot.lane.b32.xlu0 %v245, 111
        %v247 = vpop.permute.xlu0 %246
        %v248 = vrot.slane %v247, 4
        %vm249 = vcmask 908288
        %v250 = vsel %vm249, %v248, %v247
        %v253 = vmul.f32 %v233, %v250
        %v254 = vmul.f32 %v234, %v248
        %v257 = vcombine.high %v253, %v253
        %258 = vrot.lane.b32.xlu0 %v253, 17
        %v259 = vpop.permute.xlu0 %258
        %260 = vrot.lane.b32.xlu0 %v257, 17
        %v261 = vpop.permute.xlu0 %260
        %262 = vrot.lane.b32.xlu0 %v254, 17
        %v263 = vpop.permute.xlu0 %262
        %vm264 = vcmask 138240
        %v265 = vsel %vm264, %v259, %v261
        %v266 = vsel %vm264, %v261, %v263
        %269 = vst [vmem:[#allocation3] sm:$0xf] %v265
        %270 = vst [vmem:[#allocation3 + $0x8] sm:$0xf] %v266
        %s271 = scalar_lea.vmem [#allocation7], 1
        %v272 = vld [vmem:[%s271] ss:$8 sm:$0x3]
        %v274 = vlaneseq
        %v275 = vshrl.u32 %v274, 7
        %v276 = vsub.s32 0, %v275
        %v277 = vrot.slane %v272, %v276
        %v278 = vlaneseq
        %v279 = vshrl.u32 %v278, 7
        %v280 = vsub.s32 1, %v279
        %v281 = vrot.slane %v272, %v280
        %v282 = vcombine.low %v277, %v281
        %283 = vrot.lane.b32.xlu0 %v282, 112
        %v284 = vpop.permute.xlu0 %283
        %v285 = vrot.slane %v284, 4
        %vm286 = vcmask 916480
        %v287 = vsel %vm286, %v285, %v284
        %v290 = vmul.f32 %v233, %v287
        %v291 = vmul.f32 %v234, %v285
        %v294 = vcombine.low %v290, %v290
        %v295 = vcombine.low %v291, %v291
        %296 = vrot.lane.b32.xlu0 %v294, 16
        %v297 = vpop.permute.xlu0 %296
        %298 = vrot.lane.b32.xlu0 %v290, 16
        %v299 = vpop.permute.xlu0 %298
        %300 = vrot.lane.b32.xlu0 %v295, 16
        %v301 = vpop.permute.xlu0 %300
        %vm302 = vcmask 130048
        %v303 = vsel %vm302, %v297, %v299
        %v304 = vsel %vm302, %v299, %v301
        %307 = vst [vmem:[#allocation3] sm:$0xf0] %v303
        %308 = vst [vmem:[#allocation3 + $0x8] sm:$0xf0] %v304
        %s309 = scalar_lea.vmem [#allocation7], 2
        %v310 = vld [vmem:[%s309] ss:$8 sm:$0x3]
        %v312 = vlaneseq
        %v313 = vshrl.u32 %v312, 7
        %v314 = vsub.s32 0, %v313
        %v315 = vrot.slane %v310, %v314
        %v316 = vlaneseq
        %v317 = vshrl.u32 %v316, 7
        %v318 = vsub.s32 1, %v317
        %v319 = vrot.slane %v310, %v318
        %v320 = vcombine.low %v315, %v319
        %321 = vrot.lane.b32.xlu0 %v320, 113
        %v322 = vpop.permute.xlu0 %321
        %v323 = vrot.slane %v322, 4
        %vm324 = vcmask 924672
        %v325 = vsel %vm324, %v323, %v322
        %v328 = vmul.f32 %v233, %v325
        %v329 = vmul.f32 %v234, %v323
        %v332 = vcombine.high %v328, %v328
        %333 = vrot.lane.b32.xlu0 %v328, 15
        %v334 = vpop.permute.xlu0 %333
        %335 = vrot.lane.b32.xlu0 %v332, 15
        %v336 = vpop.permute.xlu0 %335
        %337 = vrot.lane.b32.xlu0 %v329, 15
        %v338 = vpop.permute.xlu0 %337
        %vm339 = vcmask 121856
        %v340 = vsel %vm339, %v334, %v336
        %v341 = vsel %vm339, %v336, %v338
        %344 = vst [vmem:[#allocation3 + $0x10] sm:$0xf] %v340
        %345 = vst [vmem:[#allocation3 + $0x18] sm:$0xf] %v341
        %s346 = scalar_lea.vmem [#allocation7], 3
        %v347 = vld [vmem:[%s346] ss:$8 sm:$0x3]
        %v349 = vlaneseq
        %v350 = vshrl.u32 %v349, 7
        %v351 = vsub.s32 0, %v350
        %v352 = vrot.slane %v347, %v351
        %v353 = vlaneseq
        %v354 = vshrl.u32 %v353, 7
        %v355 = vsub.s32 1, %v354
        %v356 = vrot.slane %v347, %v355
        %v357 = vcombine.low %v352, %v356
        %358 = vrot.lane.b32.xlu0 %v357, 127
        %v359 = vpop.permute.xlu0 %358
        %v360 = vrot.slane %v359, 4
        %vm361 = vcmask 1039360
        %v362 = vsel %vm361, %v360, %v359
        %v365 = vmul.f32 %v233, %v362
        %v366 = vmul.f32 %v234, %v360
        %v369 = vcombine.low %v365, %v365
        %v370 = vcombine.low %v366, %v366
        %371 = vrot.lane.b32.xlu0 %v369, 1
        %v372 = vpop.permute.xlu0 %371
        %373 = vrot.lane.b32.xlu0 %v365, 1
        %v374 = vpop.permute.xlu0 %373
        %375 = vrot.lane.b32.xlu0 %v370, 1
        %v376 = vpop.permute.xlu0 %375
        %vm377 = vcmask 7168
        %v378 = vsel %vm377, %v372, %v374
        %v379 = vsel %vm377, %v374, %v376
        %382 = vst [vmem:[#allocation3 + $0x10] sm:$0xf0] %v378
        %383 = vst [vmem:[#allocation3 + $0x18] sm:$0xf0] %v379
        %s384 = scalar_lea.vmem [#allocation7], 4
        %v385 = vld [vmem:[%s384] ss:$8 sm:$0x3]
        %v387 = vlaneseq
        %v388 = vshrl.u32 %v387, 7
        %v389 = vsub.s32 0, %v388
        %v390 = vrot.slane %v385, %v389
        %v391 = vlaneseq
        %v392 = vshrl.u32 %v391, 7
        %v393 = vsub.s32 1, %v392
        %v394 = vrot.slane %v385, %v393
        %v397 = vrot.slane %v233, 4
        %v398 = vrot.slane %v234, 4
        %vm399 = vcmask 1043456
        %v400 = vsel %vm399, %v397, %v398
        %v402 = vcombine.low %v390, %v394
        %v404 = vmul.f32 %v400, %v402
        %v406 = vcombine.high %v404, %v404
        %408 = vst [vmem:[#allocation3 + $0x20] sm:$0xf] %v404
        %409 = vst [vmem:[#allocation3 + $0x28] sm:$0xf] %v406
        %s410 = scalar_lea.vmem [#allocation7], 5
        %v411 = vld [vmem:[%s410] ss:$8 sm:$0x3]
        %v413 = vlaneseq
        %v414 = vshrl.u32 %v413, 7
        %v415 = vsub.s32 0, %v414
        %v416 = vrot.slane %v411, %v415
        %v417 = vlaneseq
        %v418 = vshrl.u32 %v417, 7
        %v419 = vsub.s32 1, %v418
        %v420 = vrot.slane %v411, %v419
        %421 = vrot.lane.b32.xlu0 %v233, 127
        %v422 = vpop.permute.xlu0 %421
        %423 = vrot.lane.b32.xlu0 %v234, 127
        %v424 = vpop.permute.xlu0 %423
        %v425 = vrot.slane %v422, 4
        %v426 = vrot.slane %v424, 4
        %v427 = vsel %vm399, %v425, %v426
        %v428 = vsel %vm361, %v427, %v424
        %v430 = vcombine.low %v416, %v420
        %v432 = vmul.f32 %v428, %v430
        %v434 = vcombine.low %v432, %v432
        %436 = vst [vmem:[#allocation3 + $0x20] sm:$0xf0] %v434
        %437 = vst [vmem:[#allocation3 + $0x28] sm:$0xf0] %v432
        %s438 = scalar_lea.vmem [#allocation7], 6
        %v439 = vld [vmem:[%s438] ss:$8 sm:$0x3]
        %v441 = vlaneseq
        %v442 = vshrl.u32 %v441, 7
        %v443 = vsub.s32 0, %v442
        %v444 = vrot.slane %v439, %v443
        %v445 = vlaneseq
        %v446 = vshrl.u32 %v445, 7
        %v447 = vsub.s32 1, %v446
        %v448 = vrot.slane %v439, %v447
        %449 = vrot.lane.b32.xlu0 %v233, 113
        %v450 = vpop.permute.xlu0 %449
        %451 = vrot.lane.b32.xlu0 %v234, 113
        %v452 = vpop.permute.xlu0 %451
        %v453 = vrot.slane %v450, 4
        %v454 = vrot.slane %v452, 4
        %v455 = vsel %vm399, %v453, %v454
        %v456 = vsel %vm324, %v455, %v452
        %v458 = vcombine.low %v444, %v448
        %v460 = vmul.f32 %v456, %v458
        %v462 = vcombine.high %v460, %v460
        %464 = vst [vmem:[#allocation3 + $0x30] sm:$0xf] %v460
        %465 = vst [vmem:[#allocation3 + $0x38] sm:$0xf] %v462
        %s466 = scalar_lea.vmem [#allocation7], 7
        %v467 = vld [vmem:[%s466] ss:$8 sm:$0x3]
        %v469 = vlaneseq
        %v470 = vshrl.u32 %v469, 7
        %v471 = vsub.s32 0, %v470
        %v472 = vrot.slane %v467, %v471
        %v473 = vlaneseq
        %v474 = vshrl.u32 %v473, 7
        %v475 = vsub.s32 1, %v474
        %v476 = vrot.slane %v467, %v475
        %477 = vrot.lane.b32.xlu0 %v233, 112
        %v478 = vpop.permute.xlu0 %477
        %479 = vrot.lane.b32.xlu0 %v234, 112
        %v480 = vpop.permute.xlu0 %479
        %v481 = vrot.slane %v478, 4
        %v482 = vrot.slane %v480, 4
        %v483 = vsel %vm399, %v481, %v482
        %v484 = vsel %vm286, %v483, %v480
        %v486 = vcombine.low %v472, %v476
        %v488 = vmul.f32 %v484, %v486
        %v490 = vcombine.low %v488, %v488
        %492 = vst [vmem:[#allocation3 + $0x30] sm:$0xf0] %v490
        %493 = vst [vmem:[#allocation3 + $0x38] sm:$0xf0] %v488
        %s494 = scalar_lea.vmem [#allocation7], 16
        %v495 = vld [vmem:[%s494] ss:$8 sm:$0x3]
        %v497 = vlaneseq
        %v498 = vshrl.u32 %v497, 7
        %v499 = vsub.s32 0, %v498
        %v500 = vrot.slane %v495, %v499
        %v501 = vlaneseq
        %v502 = vshrl.u32 %v501, 7
        %v503 = vsub.s32 1, %v502
        %v504 = vrot.slane %v495, %v503
        %505 = vrot.lane.b32.xlu0 %v233, 111
        %v506 = vpop.permute.xlu0 %505
        %507 = vrot.lane.b32.xlu0 %v234, 111
        %v508 = vpop.permute.xlu0 %507
        %v509 = vrot.slane %v506, 4
        %v510 = vrot.slane %v508, 4
        %v511 = vsel %vm399, %v509, %v510
        %v512 = vsel %vm249, %v511, %v508
        %v514 = vcombine.low %v500, %v504
        %v516 = vmul.f32 %v512, %v514
        %v518 = vcombine.high %v516, %v516
        %520 = vst [vmem:[#allocation3 + $0x40] sm:$0xf] %v516
        %521 = vst [vmem:[#allocation3 + $0x48] sm:$0xf] %v518
        %v522 = vld [vmem:[%s1] sm:$0xff]
        %v523 = vld [vmem:[#allocation3] sm:$0xff]
        %v524 = vld [vmem:[#allocation3 + $0x8] sm:$0xff]
        %v525 = vld [vmem:[#allocation3 + $0x10] sm:$0xff]
        %v526 = vld [vmem:[#allocation3 + $0x18] sm:$0xff]
        %v527 = vld [vmem:[#allocation3 + $0x20] sm:$0xff]
        %v528 = vld [vmem:[#allocation3 + $0x28] sm:$0xff]
        %v529 = vld [vmem:[#allocation3 + $0x30] sm:$0xff]
        %v530 = vld [vmem:[#allocation3 + $0x38] sm:$0xff]
        %v531 = vld [vmem:[#allocation3 + $0x40] sm:$0xf]
        %v532 = vld [vmem:[#allocation3 + $0x48] sm:$0xf]
        %v533 = vld [vmem:[%s2] sm:$0xff]
        %535 = vset.pattern.permute.xlu0 0
        %536 = vperm.xlu0 %535, %v533
        %v537 = vpop.permute.xlu0 %536
        %vm539 = vcmask 293888
        %v541 = vsel %vm539, %v522, 0
        %v544 = vsel %vm399, %v531, 0
        %v547 = vsel %vm399, %v532, 0
        %v549 = vand.u32 %v524, 4294901760
        %550 = vmatprep.subr.mxu0 %v549
        %v551 = vand.u32 %v523, 4294901760
        %552 = vmatpush1.msra.mxu0 %v551
        %v553 = vand.u32 %v526, 4294901760
        %554 = vmatprep.subr.mxu0 %v553
        %v555 = vand.u32 %v525, 4294901760
        %556 = vmatpush1.msra.mxu0 %v555
        %v557 = vand.u32 %v528, 4294901760
        %558 = vmatprep.subr.mxu0 %v557
        %v559 = vand.u32 %v527, 4294901760
        %560 = vmatpush1.msra.mxu0 %v559
        %v561 = vand.u32 %v530, 4294901760
        %562 = vmatprep.subr.mxu0 %v561
        %v563 = vand.u32 %v529, 4294901760
        %564 = vmatpush1.msra.mxu0 %v563
        %v565 = vand.u32 %v547, 4294901760
        %566 = vmatprep.subr.mxu0 %v565
        %v567 = vand.u32 %v544, 4294901760
        %568 = vmatpush1.msra.mxu0 %v567
        %569 = vmatprep.subr.mxu0 0.0
        %570 = vmatpush1.msra.mxu0 0.0
        %571 = vmatprep.subr.mxu0 0.0
        %572 = vmatpush1.msra.mxu0 0.0
        %573 = vmatprep.subr.mxu0 0.0
        %574 = vmatpush1.msra.mxu0 0.0
        %575 = vmatprep.subr.mxu0 0.0
        %576 = vmatpush1.msra.mxu0 0.0
        %577 = vmatprep.subr.mxu0 0.0
        %578 = vmatpush1.msra.mxu0 0.0
        %579 = vmatprep.subr.mxu0 0.0
        %580 = vmatpush1.msra.mxu0 0.0
        %581 = vmatprep.subr.mxu0 0.0
        %582 = vmatpush1.msra.mxu0 0.0
        %583 = vmatprep.subr.mxu0 0.0
        %584 = vmatpush1.msra.mxu0 0.0
        %585 = vmatprep.subr.mxu0 0.0
        %586 = vmatpush1.msra.mxu0 0.0
        %587 = vmatprep.subr.mxu0 0.0
        %588 = vmatpush1.msra.mxu0 0.0
        %589 = vmatprep.subr.mxu0 0.0
        %590 = vmatpush1.msra.mxu0 0.0
        %591 = vmatprep.subr.mxu0 0.0
        %592 = vmatpush1.msra.mxu0 0.0
        %593 = vmatprep.subr.mxu0 0.0
        %594 = vmatpush1.msra.mxu0 0.0
        %595 = vmatprep.subr.mxu0 0.0
        %596 = vmatpush1.msra.mxu0 0.0
        %597 = vmatprep.subr.mxu0 0.0
        %598 = vmatpush1.msra.mxu0 0.0
        %599 = vmatprep.subr.mxu0 0.0
        %600 = vmatpush1.msra.mxu0 0.0
        %601 = vmatprep.subr.mxu0 0.0
        %602 = vmatpush1.msra.mxu0 0.0
        %603 = vmatprep.subr.mxu0 0.0
        %604 = vmatpush1.msra.mxu0 0.0
        %605 = vmatprep.subr.mxu0 0.0
        %606 = vmatpush1.msra.mxu0 0.0
        %607 = vmatprep.subr.mxu0 0.0
        %608 = vmatpush1.msra.mxu0 0.0
        %609 = vmatprep.subr.mxu0 0.0
        %610 = vmatpush1.msra.mxu0 0.0
        %611 = vmatprep.subr.mxu0 0.0
        %612 = vmatpush1.msra.mxu0 0.0
        %613 = vmatprep.subr.mxu0 0.0
        %614 = vmatpush1.msra.mxu0 0.0
        %615 = vmatprep.subr.mxu0 0.0
        %616 = vmatpush1.msra.mxu0 0.0
        %617 = vmatprep.subr.mxu0 0.0
        %618 = vmatpush1.msra.mxu0 0.0
        %619 = vmatprep.subr.mxu0 0.0
        %620 = vmatpush1.msra.mxu0 0.0
        %621 = vmatprep.subr.mxu0 0.0
        %622 = vmatpush1.msra.mxu0 0.0
        %623 = vmatprep.mubr.f32.mxu0 0.0
        %v624 = vand.u32 %v541, 4294901760
        %v625 = vsub.f32 %v541, %v624
        %v626 = vand.u32 %v625, 4294901760
        %v627 = vsub.f32 %v625, %v626
        %v628 = vand.u32 %v627, 4294901760
        %629 = vmatmul.mubr.f32.gmra.mrb[0].mxu0 %v628
        %v630 = vpop.f32.mrb[0].mxu0
        %v631 = vadd.f32 %v537, %v630
        %v632 = vpop.f32.mrb[0].mxu0
        %v633 = vadd.f32 %v537, %v632
        %634 = vdwg.mxu0
        %v635 = vand.u32 %v524, 4294901760
        %v636 = vsub.f32 %v524, %v635
        %v637 = vand.u32 %v636, 4294901760
        %v638 = vsub.f32 %v636, %v637
        %v639 = vand.u32 %v638, 4294901760
        %640 = vmatprep.subr.mxu0 %v639
        %v641 = vand.u32 %v523, 4294901760
        %v642 = vsub.f32 %v523, %v641
        %v643 = vand.u32 %v642, 4294901760
        %v644 = vsub.f32 %v642, %v643
        %v645 = vand.u32 %v644, 4294901760
        %646 = vmatpush1.msra.mxu0 %v645
        %v647 = vand.u32 %v526, 4294901760
        %v648 = vsub.f32 %v526, %v647
        %v649 = vand.u32 %v648, 4294901760
        %v650 = vsub.f32 %v648, %v649
        %v651 = vand.u32 %v650, 4294901760
        %652 = vmatprep.subr.mxu0 %v651
        %v653 = vand.u32 %v525, 4294901760
        %v654 = vsub.f32 %v525, %v653
        %v655 = vand.u32 %v654, 4294901760
        %v656 = vsub.f32 %v654, %v655
        %v657 = vand.u32 %v656, 4294901760
        %658 = vmatpush1.msra.mxu0 %v657
        %v659 = vand.u32 %v528, 4294901760
        %v660 = vsub.f32 %v528, %v659
        %v661 = vand.u32 %v660, 4294901760
        %v662 = vsub.f32 %v660, %v661
        %v663 = vand.u32 %v662, 4294901760
        %664 = vmatprep.subr.mxu0 %v663
        %v665 = vand.u32 %v527, 4294901760
        %v666 = vsub.f32 %v527, %v665
        %v667 = vand.u32 %v666, 4294901760
        %v668 = vsub.f32 %v666, %v667
        %v669 = vand.u32 %v668, 4294901760
        %670 = vmatpush1.msra.mxu0 %v669
        %v671 = vand.u32 %v530, 4294901760
        %v672 = vsub.f32 %v530, %v671
        %v673 = vand.u32 %v672, 4294901760
        %v674 = vsub.f32 %v672, %v673
        %v675 = vand.u32 %v674, 4294901760
        %676 = vmatprep.subr.mxu0 %v675
        %v677 = vand.u32 %v529, 4294901760
        %v678 = vsub.f32 %v529, %v677
        %v679 = vand.u32 %v678, 4294901760
        %v680 = vsub.f32 %v678, %v679
        %v681 = vand.u32 %v680, 4294901760
        %682 = vmatpush1.msra.mxu0 %v681
        %v683 = vand.u32 %v547, 4294901760
        %v684 = vsub.f32 %v547, %v683
        %v685 = vand.u32 %v684, 4294901760
        %v686 = vsub.f32 %v684, %v685
        %v687 = vand.u32 %v686, 4294901760
        %688 = vmatprep.subr.mxu0 %v687
        %v689 = vand.u32 %v544, 4294901760
        %v690 = vsub.f32 %v544, %v689
        %v691 = vand.u32 %v690, 4294901760
        %v692 = vsub.f32 %v690, %v691
        %v693 = vand.u32 %v692, 4294901760
        %694 = vmatpush1.msra.mxu0 %v693
        %695 = vmatprep.subr.mxu0 0.0
        %696 = vmatpush1.msra.mxu0 0.0
        %697 = vmatprep.subr.mxu0 0.0
        %698 = vmatpush1.msra.mxu0 0.0
        %699 = vmatprep.subr.mxu0 0.0
        %700 = vmatpush1.msra.mxu0 0.0
        %701 = vmatprep.subr.mxu0 0.0
        %702 = vmatpush1.msra.mxu0 0.0
        %703 = vmatprep.subr.mxu0 0.0
        %704 = vmatpush1.msra.mxu0 0.0
        %705 = vmatprep.subr.mxu0 0.0
        %706 = vmatpush1.msra.mxu0 0.0
        %707 = vmatprep.subr.mxu0 0.0
        %708 = vmatpush1.msra.mxu0 0.0
        %709 = vmatprep.subr.mxu0 0.0
        %710 = vmatpush1.msra.mxu0 0.0
        %711 = vmatprep.subr.mxu0 0.0
        %712 = vmatpush1.msra.mxu0 0.0
        %713 = vmatprep.subr.mxu0 0.0
        %714 = vmatpush1.msra.mxu0 0.0
        %715 = vmatprep.subr.mxu0 0.0
        %716 = vmatpush1.msra.mxu0 0.0
        %717 = vmatprep.subr.mxu0 0.0
        %718 = vmatpush1.msra.mxu0 0.0
        %719 = vmatprep.subr.mxu0 0.0
        %720 = vmatpush1.msra.mxu0 0.0
        %721 = vmatprep.subr.mxu0 0.0
        %722 = vmatpush1.msra.mxu0 0.0
        %723 = vmatprep.subr.mxu0 0.0
        %724 = vmatpush1.msra.mxu0 0.0
        %725 = vmatprep.subr.mxu0 0.0
        %726 = vmatpush1.msra.mxu0 0.0
        %727 = vmatprep.subr.mxu0 0.0
        %728 = vmatpush1.msra.mxu0 0.0
        %729 = vmatprep.subr.mxu0 0.0
        %730 = vmatpush1.msra.mxu0 0.0
        %731 = vmatprep.subr.mxu0 0.0
        %732 = vmatpush1.msra.mxu0 0.0
        %733 = vmatprep.subr.mxu0 0.0
        %734 = vmatpush1.msra.mxu0 0.0
        %735 = vmatprep.subr.mxu0 0.0
        %736 = vmatpush1.msra.mxu0 0.0
        %737 = vmatprep.subr.mxu0 0.0
        %738 = vmatpush1.msra.mxu0 0.0
        %739 = vmatprep.subr.mxu0 0.0
        %740 = vmatpush1.msra.mxu0 0.0
        %741 = vmatprep.subr.mxu0 0.0
        %742 = vmatpush1.msra.mxu0 0.0
        %743 = vmatprep.subr.mxu0 0.0
        %744 = vmatpush1.msra.mxu0 0.0
        %745 = vmatprep.subr.mxu0 0.0
        %746 = vmatpush1.msra.mxu0 0.0
        %747 = vmatprep.subr.mxu0 0.0
        %748 = vmatpush1.msra.mxu0 0.0
        %749 = vmatprep.mubr.f32.mxu0 0.0
        %v750 = vand.u32 %v541, 4294901760
        %751 = vmatmul.mubr.f32.gmra.mrb[0].mxu0 %v750
        %v752 = vpop.f32.mrb[0].mxu0
        %v753 = vadd.f32 %v631, %v752
        %v754 = vpop.f32.mrb[0].mxu0
        %v755 = vadd.f32 %v633, %v754
        %756 = vdwg.mxu0
        %v757 = vand.u32 %v524, 4294901760
        %v758 = vsub.f32 %v524, %v757
        %759 = vmatprep.subr.mxu0 %v758
        %v760 = vand.u32 %v523, 4294901760
        %v761 = vsub.f32 %v523, %v760
        %762 = vmatpush1.msra.mxu0 %v761
        %v763 = vand.u32 %v526, 4294901760
        %v764 = vsub.f32 %v526, %v763
        %765 = vmatprep.subr.mxu0 %v764
        %v766 = vand.u32 %v525, 4294901760
        %v767 = vsub.f32 %v525, %v766
        %768 = vmatpush1.msra.mxu0 %v767
        %v769 = vand.u32 %v528, 4294901760
        %v770 = vsub.f32 %v528, %v769
        %771 = vmatprep.subr.mxu0 %v770
        %v772 = vand.u32 %v527, 4294901760
        %v773 = vsub.f32 %v527, %v772
        %774 = vmatpush1.msra.mxu0 %v773
        %v775 = vand.u32 %v530, 4294901760
        %v776 = vsub.f32 %v530, %v775
        %777 = vmatprep.subr.mxu0 %v776
        %v778 = vand.u32 %v529, 4294901760
        %v779 = vsub.f32 %v529, %v778
        %780 = vmatpush1.msra.mxu0 %v779
        %v781 = vand.u32 %v547, 4294901760
        %v782 = vsub.f32 %v547, %v781
        %783 = vmatprep.subr.mxu0 %v782
        %v784 = vand.u32 %v544, 4294901760
        %v785 = vsub.f32 %v544, %v784
        %786 = vmatpush1.msra.mxu0 %v785
        %787 = vmatprep.subr.mxu0 0.0
        %788 = vmatpush1.msra.mxu0 0.0
        %789 = vmatprep.subr.mxu0 0.0
        %790 = vmatpush1.msra.mxu0 0.0
        %791 = vmatprep.subr.mxu0 0.0
        %792 = vmatpush1.msra.mxu0 0.0
        %793 = vmatprep.subr.mxu0 0.0
        %794 = vmatpush1.msra.mxu0 0.0
        %795 = vmatprep.subr.mxu0 0.0
        %796 = vmatpush1.msra.mxu0 0.0
        %797 = vmatprep.subr.mxu0 0.0
        %798 = vmatpush1.msra.mxu0 0.0
        %799 = vmatprep.subr.mxu0 0.0
        %800 = vmatpush1.msra.mxu0 0.0
        %801 = vmatprep.subr.mxu0 0.0
        %802 = vmatpush1.msra.mxu0 0.0
        %803 = vmatprep.subr.mxu0 0.0
        %804 = vmatpush1.msra.mxu0 0.0
        %805 = vmatprep.subr.mxu0 0.0
        %806 = vmatpush1.msra.mxu0 0.0
        %807 = vmatprep.subr.mxu0 0.0
        %808 = vmatpush1.msra.mxu0 0.0
        %809 = vmatprep.subr.mxu0 0.0
        %810 = vmatpush1.msra.mxu0 0.0
        %811 = vmatprep.subr.mxu0 0.0
        %812 = vmatpush1.msra.mxu0 0.0
        %813 = vmatprep.subr.mxu0 0.0
        %814 = vmatpush1.msra.mxu0 0.0
        %815 = vmatprep.subr.mxu0 0.0
        %816 = vmatpush1.msra.mxu0 0.0
        %817 = vmatprep.subr.mxu0 0.0
        %818 = vmatpush1.msra.mxu0 0.0
        %819 = vmatprep.subr.mxu0 0.0
        %820 = vmatpush1.msra.mxu0 0.0
        %821 = vmatprep.subr.mxu0 0.0
        %822 = vmatpush1.msra.mxu0 0.0
        %823 = vmatprep.subr.mxu0 0.0
        %824 = vmatpush1.msra.mxu0 0.0
        %825 = vmatprep.subr.mxu0 0.0
        %826 = vmatpush1.msra.mxu0 0.0
        %827 = vmatprep.subr.mxu0 0.0
        %828 = vmatpush1.msra.mxu0 0.0
        %829 = vmatprep.subr.mxu0 0.0
        %830 = vmatpush1.msra.mxu0 0.0
        %831 = vmatprep.subr.mxu0 0.0
        %832 = vmatpush1.msra.mxu0 0.0
        %833 = vmatprep.subr.mxu0 0.0
        %834 = vmatpush1.msra.mxu0 0.0
        %835 = vmatprep.subr.mxu0 0.0
        %836 = vmatpush1.msra.mxu0 0.0
        %837 = vmatprep.subr.mxu0 0.0
        %838 = vmatpush1.msra.mxu0 0.0
        %839 = vmatprep.subr.mxu0 0.0
        %840 = vmatpush1.msra.mxu0 0.0
        %841 = vmatprep.mubr.f32.mxu0 0.0
        %v842 = vand.u32 %v541, 4294901760
        %v843 = vsub.f32 %v541, %v842
        %844 = vmatmul.mubr.f32.gmra.mrb[0].mxu0 %v843
        %v845 = vpop.f32.mrb[0].mxu0
        %v846 = vadd.f32 %v753, %v845
        %v847 = vpop.f32.mrb[0].mxu0
        %v848 = vadd.f32 %v755, %v847
        %849 = vdwg.mxu0
        %v850 = vand.u32 %v524, 4294901760
        %851 = vmatprep.subr.mxu0 %v850
        %v852 = vand.u32 %v523, 4294901760
        %853 = vmatpush1.msra.mxu0 %v852
        %v854 = vand.u32 %v526, 4294901760
        %855 = vmatprep.subr.mxu0 %v854
        %v856 = vand.u32 %v525, 4294901760
        %857 = vmatpush1.msra.mxu0 %v856
        %v858 = vand.u32 %v528, 4294901760
        %859 = vmatprep.subr.mxu0 %v858
        %v860 = vand.u32 %v527, 4294901760
        %861 = vmatpush1.msra.mxu0 %v860
        %v862 = vand.u32 %v530, 4294901760
        %863 = vmatprep.subr.mxu0 %v862
        %v864 = vand.u32 %v529, 4294901760
        %865 = vmatpush1.msra.mxu0 %v864
        %v866 = vand.u32 %v547, 4294901760
        %867 = vmatprep.subr.mxu0 %v866
        %v868 = vand.u32 %v544, 4294901760
        %869 = vmatpush1.msra.mxu0 %v868
        %870 = vmatprep.subr.mxu0 0.0
        %871 = vmatpush1.msra.mxu0 0.0
        %872 = vmatprep.subr.mxu0 0.0
        %873 = vmatpush1.msra.mxu0 0.0
        %874 = vmatprep.subr.mxu0 0.0
        %875 = vmatpush1.msra.mxu0 0.0
        %876 = vmatprep.subr.mxu0 0.0
        %877 = vmatpush1.msra.mxu0 0.0
        %878 = vmatprep.subr.mxu0 0.0
        %879 = vmatpush1.msra.mxu0 0.0
        %880 = vmatprep.subr.mxu0 0.0
        %881 = vmatpush1.msra.mxu0 0.0
        %882 = vmatprep.subr.mxu0 0.0
        %883 = vmatpush1.msra.mxu0 0.0
        %884 = vmatprep.subr.mxu0 0.0
        %885 = vmatpush1.msra.mxu0 0.0
        %886 = vmatprep.subr.mxu0 0.0
        %887 = vmatpush1.msra.mxu0 0.0
        %888 = vmatprep.subr.mxu0 0.0
        %889 = vmatpush1.msra.mxu0 0.0
        %890 = vmatprep.subr.mxu0 0.0
        %891 = vmatpush1.msra.mxu0 0.0
        %892 = vmatprep.subr.mxu0 0.0
        %893 = vmatpush1.msra.mxu0 0.0
        %894 = vmatprep.subr.mxu0 0.0
        %895 = vmatpush1.msra.mxu0 0.0
        %896 = vmatprep.subr.mxu0 0.0
        %897 = vmatpush1.msra.mxu0 0.0
        %898 = vmatprep.subr.mxu0 0.0
        %899 = vmatpush1.msra.mxu0 0.0
        %900 = vmatprep.subr.mxu0 0.0
        %901 = vmatpush1.msra.mxu0 0.0
        %902 = vmatprep.subr.mxu0 0.0
        %903 = vmatpush1.msra.mxu0 0.0
        %904 = vmatprep.subr.mxu0 0.0
        %905 = vmatpush1.msra.mxu0 0.0
        %906 = vmatprep.subr.mxu0 0.0
        %907 = vmatpush1.msra.mxu0 0.0
        %908 = vmatprep.subr.mxu0 0.0
        %909 = vmatpush1.msra.mxu0 0.0
        %910 = vmatprep.subr.mxu0 0.0
        %911 = vmatpush1.msra.mxu0 0.0
        %912 = vmatprep.subr.mxu0 0.0
        %913 = vmatpush1.msra.mxu0 0.0
        %914 = vmatprep.subr.mxu0 0.0
        %915 = vmatpush1.msra.mxu0 0.0
        %916 = vmatprep.subr.mxu0 0.0
        %917 = vmatpush1.msra.mxu0 0.0
        %918 = vmatprep.subr.mxu0 0.0
        %919 = vmatpush1.msra.mxu0 0.0
        %920 = vmatprep.subr.mxu0 0.0
        %921 = vmatpush1.msra.mxu0 0.0
        %922 = vmatprep.subr.mxu0 0.0
        %923 = vmatpush1.msra.mxu0 0.0
        %924 = vmatprep.mubr.f32.mxu0 0.0
        %v925 = vand.u32 %v541, 4294901760
        %v926 = vsub.f32 %v541, %v925
        %v927 = vand.u32 %v926, 4294901760
        %928 = vmatmul.mubr.f32.gmra.mrb[0].mxu0 %v927
        %v929 = vpop.f32.mrb[0].mxu0
        %v930 = vadd.f32 %v846, %v929
        %v931 = vpop.f32.mrb[0].mxu0
        %v932 = vadd.f32 %v848, %v931
        %933 = vdwg.mxu0
        %v934 = vand.u32 %v524, 4294901760
        %v935 = vsub.f32 %v524, %v934
        %v936 = vand.u32 %v935, 4294901760
        %937 = vmatprep.subr.mxu0 %v936
        %v938 = vand.u32 %v523, 4294901760
        %v939 = vsub.f32 %v523, %v938
        %v940 = vand.u32 %v939, 4294901760
        %941 = vmatpush1.msra.mxu0 %v940
        %v942 = vand.u32 %v526, 4294901760
        %v943 = vsub.f32 %v526, %v942
        %v944 = vand.u32 %v943, 4294901760
        %945 = vmatprep.subr.mxu0 %v944
        %v946 = vand.u32 %v525, 4294901760
        %v947 = vsub.f32 %v525, %v946
        %v948 = vand.u32 %v947, 4294901760
        %949 = vmatpush1.msra.mxu0 %v948
        %v950 = vand.u32 %v528, 4294901760
        %v951 = vsub.f32 %v528, %v950
        %v952 = vand.u32 %v951, 4294901760
        %953 = vmatprep.subr.mxu0 %v952
        %v954 = vand.u32 %v527, 4294901760
        %v955 = vsub.f32 %v527, %v954
        %v956 = vand.u32 %v955, 4294901760
        %957 = vmatpush1.msra.mxu0 %v956
        %v958 = vand.u32 %v530, 4294901760
        %v959 = vsub.f32 %v530, %v958
        %v960 = vand.u32 %v959, 4294901760
        %961 = vmatprep.subr.mxu0 %v960
        %v962 = vand.u32 %v529, 4294901760
        %v963 = vsub.f32 %v529, %v962
        %v964 = vand.u32 %v963, 4294901760
        %965 = vmatpush1.msra.mxu0 %v964
        %v966 = vand.u32 %v547, 4294901760
        %v967 = vsub.f32 %v547, %v966
        %v968 = vand.u32 %v967, 4294901760
        %969 = vmatprep.subr.mxu0 %v968
        %v970 = vand.u32 %v544, 4294901760
        %v971 = vsub.f32 %v544, %v970
        %v972 = vand.u32 %v971, 4294901760
        %973 = vmatpush1.msra.mxu0 %v972
        %974 = vmatprep.subr.mxu0 0.0
        %975 = vmatpush1.msra.mxu0 0.0
        %976 = vmatprep.subr.mxu0 0.0
        %977 = vmatpush1.msra.mxu0 0.0
        %978 = vmatprep.subr.mxu0 0.0
        %979 = vmatpush1.msra.mxu0 0.0
        %980 = vmatprep.subr.mxu0 0.0
        %981 = vmatpush1.msra.mxu0 0.0
        %982 = vmatprep.subr.mxu0 0.0
        %983 = vmatpush1.msra.mxu0 0.0
        %984 = vmatprep.subr.mxu0 0.0
        %985 = vmatpush1.msra.mxu0 0.0
        %986 = vmatprep.subr.mxu0 0.0
        %987 = vmatpush1.msra.mxu0 0.0
        %988 = vmatprep.subr.mxu0 0.0
        %989 = vmatpush1.msra.mxu0 0.0
        %990 = vmatprep.subr.mxu0 0.0
        %991 = vmatpush1.msra.mxu0 0.0
        %992 = vmatprep.subr.mxu0 0.0
        %993 = vmatpush1.msra.mxu0 0.0
        %994 = vmatprep.subr.mxu0 0.0
        %995 = vmatpush1.msra.mxu0 0.0
        %996 = vmatprep.subr.mxu0 0.0
        %997 = vmatpush1.msra.mxu0 0.0
        %998 = vmatprep.subr.mxu0 0.0
        %999 = vmatpush1.msra.mxu0 0.0
        %1000 = vmatprep.subr.mxu0 0.0
        %1001 = vmatpush1.msra.mxu0 0.0
        %1002 = vmatprep.subr.mxu0 0.0
        %1003 = vmatpush1.msra.mxu0 0.0
        %1004 = vmatprep.subr.mxu0 0.0
        %1005 = vmatpush1.msra.mxu0 0.0
        %1006 = vmatprep.subr.mxu0 0.0
        %1007 = vmatpush1.msra.mxu0 0.0
        %1008 = vmatprep.subr.mxu0 0.0
        %1009 = vmatpush1.msra.mxu0 0.0
        %1010 = vmatprep.subr.mxu0 0.0
        %1011 = vmatpush1.msra.mxu0 0.0
        %1012 = vmatprep.subr.mxu0 0.0
        %1013 = vmatpush1.msra.mxu0 0.0
        %1014 = vmatprep.subr.mxu0 0.0
        %1015 = vmatpush1.msra.mxu0 0.0
        %1016 = vmatprep.subr.mxu0 0.0
        %1017 = vmatpush1.msra.mxu0 0.0
        %1018 = vmatprep.subr.mxu0 0.0
        %1019 = vmatpush1.msra.mxu0 0.0
        %1020 = vmatprep.subr.mxu0 0.0
        %1021 = vmatpush1.msra.mxu0 0.0
        %1022 = vmatprep.subr.mxu0 0.0
        %1023 = vmatpush1.msra.mxu0 0.0
        %1024 = vmatprep.subr.mxu0 0.0
        %1025 = vmatpush1.msra.mxu0 0.0
        %1026 = vmatprep.subr.mxu0 0.0
        %1027 = vmatpush1.msra.mxu0 0.0
        %1028 = vmatprep.mubr.f32.mxu0 0.0
        %v1029 = vand.u32 %v541, 4294901760
        %1030 = vmatmul.mubr.f32.gmra.mrb[0].mxu0 %v1029
        %v1031 = vpop.f32.mrb[0].mxu0
        %v1032 = vadd.f32 %v930, %v1031
        %v1033 = vpop.f32.mrb[0].mxu0
        %v1034 = vadd.f32 %v932, %v1033
        %1035 = vdwg.mxu0
        %v1036 = vand.u32 %v524, 4294901760
        %1037 = vmatprep.subr.mxu0 %v1036
        %v1038 = vand.u32 %v523, 4294901760
        %1039 = vmatpush1.msra.mxu0 %v1038
        %v1040 = vand.u32 %v526, 4294901760
        %1041 = vmatprep.subr.mxu0 %v1040
        %v1042 = vand.u32 %v525, 4294901760
        %1043 = vmatpush1.msra.mxu0 %v1042
        %v1044 = vand.u32 %v528, 4294901760
        %1045 = vmatprep.subr.mxu0 %v1044
        %v1046 = vand.u32 %v527, 4294901760
        %1047 = vmatpush1.msra.mxu0 %v1046
        %v1048 = vand.u32 %v530, 4294901760
        %1049 = vmatprep.subr.mxu0 %v1048
        %v1050 = vand.u32 %v529, 4294901760
        %1051 = vmatpush1.msra.mxu0 %v1050
        %v1052 = vand.u32 %v547, 4294901760
        %1053 = vmatprep.subr.mxu0 %v1052
        %v1054 = vand.u32 %v544, 4294901760
        %1055 = vmatpush1.msra.mxu0 %v1054
        %1056 = vmatprep.subr.mxu0 0.0
        %1057 = vmatpush1.msra.mxu0 0.0
        %1058 = vmatprep.subr.mxu0 0.0
        %1059 = vmatpush1.msra.mxu0 0.0
        %1060 = vmatprep.subr.mxu0 0.0
        %1061 = vmatpush1.msra.mxu0 0.0
        %1062 = vmatprep.subr.mxu0 0.0
        %1063 = vmatpush1.msra.mxu0 0.0
        %1064 = vmatprep.subr.mxu0 0.0
        %1065 = vmatpush1.msra.mxu0 0.0
        %1066 = vmatprep.subr.mxu0 0.0
        %1067 = vmatpush1.msra.mxu0 0.0
        %1068 = vmatprep.subr.mxu0 0.0
        %1069 = vmatpush1.msra.mxu0 0.0
        %1070 = vmatprep.subr.mxu0 0.0
        %1071 = vmatpush1.msra.mxu0 0.0
        %1072 = vmatprep.subr.mxu0 0.0
        %1073 = vmatpush1.msra.mxu0 0.0
        %1074 = vmatprep.subr.mxu0 0.0
        %1075 = vmatpush1.msra.mxu0 0.0
        %1076 = vmatprep.subr.mxu0 0.0
        %1077 = vmatpush1.msra.mxu0 0.0
        %1078 = vmatprep.subr.mxu0 0.0
        %1079 = vmatpush1.msra.mxu0 0.0
        %1080 = vmatprep.subr.mxu0 0.0
        %1081 = vmatpush1.msra.mxu0 0.0
        %1082 = vmatprep.subr.mxu0 0.0
        %1083 = vmatpush1.msra.mxu0 0.0
        %1084 = vmatprep.subr.mxu0 0.0
        %1085 = vmatpush1.msra.mxu0 0.0
        %1086 = vmatprep.subr.mxu0 0.0
        %1087 = vmatpush1.msra.mxu0 0.0
        %1088 = vmatprep.subr.mxu0 0.0
        %1089 = vmatpush1.msra.mxu0 0.0
        %1090 = vmatprep.subr.mxu0 0.0
        %1091 = vmatpush1.msra.mxu0 0.0
        %1092 = vmatprep.subr.mxu0 0.0
        %1093 = vmatpush1.msra.mxu0 0.0
        %1094 = vmatprep.subr.mxu0 0.0
        %1095 = vmatpush1.msra.mxu0 0.0
        %1096 = vmatprep.subr.mxu0 0.0
        %1097 = vmatpush1.msra.mxu0 0.0
        %1098 = vmatprep.subr.mxu0 0.0
        %1099 = vmatpush1.msra.mxu0 0.0
        %1100 = vmatprep.subr.mxu0 0.0
        %1101 = vmatpush1.msra.mxu0 0.0
        %1102 = vmatprep.subr.mxu0 0.0
        %1103 = vmatpush1.msra.mxu0 0.0
        %1104 = vmatprep.subr.mxu0 0.0
        %1105 = vmatpush1.msra.mxu0 0.0
        %1106 = vmatprep.subr.mxu0 0.0
        %1107 = vmatpush1.msra.mxu0 0.0
        %1108 = vmatprep.subr.mxu0 0.0
        %1109 = vmatpush1.msra.mxu0 0.0
        %1110 = vmatprep.mubr.f32.mxu0 0.0
        %v1111 = vand.u32 %v541, 4294901760
        %1112 = vmatmul.mubr.f32.gmra.mrb[0].mxu0 %v1111
        %v1113 = vpop.f32.mrb[0].mxu0
        %v1114 = vadd.f32 %v1032, %v1113
        %v1115 = vpop.f32.mrb[0].mxu0
        %v1116 = vadd.f32 %v1034, %v1115
        %1117 = vdwg.mxu0
        %1118 = vst [vmem:[%s228] sm:$0xff] %v1114
        %1119 = vst [vmem:[%s228 + $0x8] sm:$0xff] %v1116
        %s1120 = sand.u32 %s119, 1
        %s1121 = scalar_lea.sflag [#allocation6], %s1120
        %s1122 = sand.u32 %s119, 1
        %s1123 = smul.addr %s1122, 16
        %s1124 = scalar_lea.vmem [#allocation9], %s1123
        // Predicated region
        $region45: #{tpu_custom_call.1} parent=35 // pred_check
          %p1125 = pneg %p129
        $region46: #{tpu_custom_call.1} parent=35 // pred_check_branch
          %1127 = sbr.rel (%p1125) target = $region48
        $region47: #{tpu_custom_call.1} parent=35 // pred_region
          %s1129 = ssub.s32 256, 256
          %1130 = vsyncadd %s1121, %s1129
          %s1131 = smul.addr %s22, 2
          %s1132 = smul.addr %s1131, 128
          %s1133 = scalar_lea.hbm %s4, %s1132
          %s1135 = sshll.u32 %s1124, 4
          %s1136 = int_to_ptr.vmem [resolvable:$true] %s1135
          %1138 = dma.vmem_to_hbm [thread:$0]  %s1136, 256, %s1133, %s1121
        $region48: #{tpu_custom_call.1} parent=35 // pred_fallthru
          _
      $region36: #{tpu_custom_call.1} parent=5 // pred_fallthru
        _
      %p1139 = scmp.le.s32.totalorder 2, %s17
      // Predicated region
      $region49: #{tpu_custom_call.1} parent=5 // pred_check
        %p1140 = pneg %p1139
      $region50: #{tpu_custom_call.1} parent=5 // pred_check_branch
        %1142 = sbr.rel (%p1140) target = $region52
      $region51: #{tpu_custom_call.1} parent=5 // pred_region
        %s1143 = ssub.s32 %s17, 2
        // Predicated region
        $region53: #{tpu_custom_call.1} parent=51 // pred_check
          %p1144 = pneg %p135
        $region54: #{tpu_custom_call.1} parent=51 // pred_check_branch
          %1146 = sbr.rel (%p1144) target = $region56
        $region55: #{tpu_custom_call.1} parent=51 // pred_region
          %s1147 = sand.u32 %s120, 1
          %s1148 = scalar_lea.sflag [#allocation6], %s1147
          %s1149 = sand.u32 %s120, 1
          %s1150 = smul.addr %s1149, 16
          %s1151 = scalar_lea.vmem [#allocation9], %s1150
          %1152 = dma.done %s1148, 256
        $region56: #{tpu_custom_call.1} parent=51 // pred_fallthru
          _
      $region52: #{tpu_custom_call.1} parent=5 // pred_fallthru
        _
    $region6: #{tpu_custom_call.1} parent=1 // loop_footer
      %s21 = sadd.s32 1, %s17
    $region7: #{tpu_custom_call.1} parent=1 // loop_footer_branch
      %16 = sbr.rel target = $region3
    $region8: #{tpu_custom_call.1} parent=1 // loop_exit
      _
    %1153 = vsyncpa [#allocation5], 1
    %s1154 = scalar_lea.sflag [#allocation5], 1
    %1155 = vsyncpa %s1154, 1
    %1156 = vsyncpa [#allocation8], 1
    %1157 = vsyncpa [#allocation6], 1
    %s1158 = scalar_lea.sflag [#allocation6], 1
    %1159 = vsyncpa %s1158, 1

</llo_original>
